<compile_context>
chip_gen: v7x
topology: tpu7x:2x2x1
jax: 0.10.0
libtpu: 0.0.40
codegen_flags: <defaults>
</compile_context>

<pallas_src>
import functools
import math

import jax
import jax.numpy as jnp
from jax import lax
from jax.experimental import pallas as pl
from jax.experimental.pallas import tpu as pltpu


def _round_up(x, m):
    return (x + m - 1) // m * m


def _hash_u32(x_u32, seed_u32):
    """Murmur3-style integer finalizer: pure 32-bit VPU ops (TPU + interpret)."""
    h = x_u32 ^ seed_u32
    h = h * jnp.uint32(0x9E3779B1)
    h = h ^ (h >> 15)
    h = h * jnp.uint32(0x85EBCA77)
    h = h ^ (h >> 13)
    h = h * jnp.uint32(0xC2B2AE3D)
    h = h ^ (h >> 16)
    return h


def _epilogue(h, row0, col0, seed_u32, *, n_total, dropout_p, apply_dropout):
    """h already has bias added; apply (optional) dropout then ReLU."""
    if apply_dropout:
        tm, tn = h.shape
        # NOTE: flat index wraps mod 2^32 for >2^31-element outputs; the mask
        # stays valid/deterministic but hash uniqueness degrades at that scale.
        rows = lax.broadcasted_iota(jnp.int32, (tm, tn), 0) + row0
        cols = lax.broadcasted_iota(jnp.int32, (tm, tn), 1) + col0
        flat = (rows * n_total + cols).astype(jnp.uint32)
        rnd = _hash_u32(flat, seed_u32)
        if dropout_p >= 1.0:                       # guard: avoid inf scale
            scale = 0.0
            thresh = jnp.uint32(0xFFFFFFFF)
        else:
            scale = 1.0 / (1.0 - dropout_p)
            thresh = jnp.uint32(min(int(round(dropout_p * (2.0 ** 32))),
                                    2 ** 32 - 1))
        keep = rnd >= thresh                       # P(keep) = 1 - p
        h = jnp.where(keep, h * scale, 0.0)
    return jnp.maximum(h, 0.0)


def _linear_kernel_k1(seed_ref, x_ref, w_ref, b_ref, o_ref, *,
                      dropout_p, apply_dropout, n_total):
    """Single-K fast path: no scratch accumulator, no pl.when branches."""
    i = pl.program_id(0)
    j = pl.program_id(1)
    tm, tn = o_ref.shape
    h = jnp.dot(x_ref[...], w_ref[...], preferred_element_type=jnp.float32)
    h = h + b_ref[...].astype(jnp.float32)
    h = _epilogue(h, i * tm, j * tn, seed_ref[0].astype(jnp.uint32),
                  n_total=n_total, dropout_p=dropout_p,
                  apply_dropout=apply_dropout)
    o_ref[...] = h.astype(o_ref.dtype)


def _linear_kernel(seed_ref, x_ref, w_ref, b_ref, o_ref, acc_ref, *,
                   dropout_p, apply_dropout, n_total):
    """(M, N, K) grid with f32 VMEM accumulator; K is the innermost axis."""
    # All program_id / num_programs calls are hoisted OUT of the pl.when
    # bodies (nested program_id inside a cond branch broke interpret lowering).
    i = pl.program_id(0)
    j = pl.program_id(1)
    k = pl.program_id(2)
    nk = pl.num_programs(2)
    tm, tn = o_ref.shape
    row0 = i * tm
    col0 = j * tn
    seed_u32 = seed_ref[0].astype(jnp.uint32)

    @pl.when(k == 0)
    def _():
        acc_ref[...] = jnp.zeros_like(acc_ref)

    acc_ref[...] += jnp.dot(x_ref[...], w_ref[...],
                            preferred_element_type=jnp.float32)

    @pl.when(k == nk - 1)
    def _():
        h = acc_ref[...] + b_ref[...].astype(jnp.float32)
        h = _epilogue(h, row0, col0, seed_u32, n_total=n_total,
                      dropout_p=dropout_p, apply_dropout=apply_dropout)
        o_ref[...] = h.astype(o_ref.dtype)


class PallasLinear:
    """ReLU(dropout(x @ W + b)) with W stored as [in_features, out_features].

    W and b are padded/cast exactly once at construction so repeated forward
    calls only pad x (avoids re-copying the weight through HBM every call).
    """

    def __init__(self, w, b=None, *, dropout=0.0, tm=256, tn=512, tk=512,
                 compute_dtype=jnp.bfloat16, out_dtype=None):
        w = jnp.asarray(w)
        in_f, out_f = w.shape
        self.in_features = in_f
        self.out_features = out_f
        self.dropout = float(dropout)
        self.compute_dtype = compute_dtype
        self.out_dtype = out_dtype

        # MXU/lane aligned tiles, clamped for small layers.
        self.tm = max(8, (int(tm) // 8) * 8)
        self.tn = min(max(128, (int(tn) // 128) * 128), _round_up(out_f, 128))
        self.tk = min(max(128, (int(tk) // 128) * 128), _round_up(in_f, 128))
        self.k_pad = _round_up(in_f, self.tk)
        self.n_pad = _round_up(out_f, self.tn)

        if b is None:
            b = jnp.zeros((out_f,), jnp.float32)
        b = jnp.asarray(b, jnp.float32).reshape(1, out_f)
        if compute_dtype is not None:
            w = w.astype(compute_dtype)
        if (self.k_pad, self.n_pad) != (in_f, out_f):
            w = jnp.pad(w, ((0, self.k_pad - in_f), (0, self.n_pad - out_f)))
        if self.n_pad != out_f:
            b = jnp.pad(b, ((0, 0), (0, self.n_pad - out_f)))
        self.w = w
        self.b = b

    def __call__(self, x, *, training=False, seed=0):
        batch, in_f = x.shape
        assert in_f == self.in_features, "input feature mismatch"
        out_dtype = self.out_dtype if self.out_dtype is not None else x.dtype
        if self.compute_dtype is not None:
            x = x.astype(self.compute_dtype)

        tm = min(self.tm, _round_up(batch, 8))
        mp = _round_up(batch, tm)
        if (mp, self.k_pad) != (batch, in_f):
            x = jnp.pad(x, ((0, mp - batch), (0, self.k_pad - in_f)))

        gm = mp // tm
        gn = self.n_pad // self.tn
        gk = self.k_pad // self.tk
        apply_dropout = bool(training) and self.dropout > 0.0
        seed_arr = jnp.asarray([seed], dtype=jnp.int32)

        bytes_accessed = (x.size * x.dtype.itemsize
                          + self.w.size * self.w.dtype.itemsize
                          + self.b.size * self.b.dtype.itemsize
                          + mp * self.n_pad * jnp.dtype(out_dtype).itemsize)
        cost = pl.CostEstimate(flops=2 * mp * self.k_pad * self.n_pad,
                               transcendentals=0,
                               bytes_accessed=bytes_accessed)

        if gk == 1:
            kernel = functools.partial(_linear_kernel_k1,
                                       dropout_p=self.dropout,
                                       apply_dropout=apply_dropout,
                                       n_total=int(self.n_pad))
            grid_spec = pltpu.PrefetchScalarGridSpec(
                num_scalar_prefetch=1,                   # seed -> SMEM
                grid=(gm, gn),
                in_specs=[
                    pl.BlockSpec((tm, self.k_pad), lambda i, j, s: (i, 0)),
                    pl.BlockSpec((self.k_pad, self.tn), lambda i, j, s: (0, j)),
                    pl.BlockSpec((1, self.tn), lambda i, j, s: (0, j)),
                ],
                out_specs=pl.BlockSpec((tm, self.tn), lambda i, j, s: (i, j)),
            )
            dims = ("parallel", "parallel")
        else:
            kernel = functools.partial(_linear_kernel,
                                       dropout_p=self.dropout,
                                       apply_dropout=apply_dropout,
                                       n_total=int(self.n_pad))
            grid_spec = pltpu.PrefetchScalarGridSpec(
                num_scalar_prefetch=1,                   # seed -> SMEM
                grid=(gm, gn, gk),
                in_specs=[
                    pl.BlockSpec((tm, self.tk), lambda i, j, k, s: (i, k)),
                    pl.BlockSpec((self.tk, self.tn), lambda i, j, k, s: (k, j)),
                    pl.BlockSpec((1, self.tn), lambda i, j, k, s: (0, j)),
                ],
                out_specs=pl.BlockSpec((tm, self.tn),
                                       lambda i, j, k, s: (i, j)),
                scratch_shapes=[pltpu.VMEM((tm, self.tn), jnp.float32)],
            )
            dims = ("parallel", "parallel", "arbitrary")

        out = pl.pallas_call(
            kernel,
            out_shape=jax.ShapeDtypeStruct((mp, self.n_pad), out_dtype),
            grid_spec=grid_spec,
            compiler_params=pltpu.CompilerParams(
                dimension_semantics=dims,
                vmem_limit_bytes=48 * 1024 * 1024),
            cost_estimate=cost,
        )(seed_arr, x, self.w, self.b)

        return out[:batch, :self.out_features]


if __name__ == "__main__":
    # Module config: Linear(in_features=32, out_features=64, dropout=0.5,
    #                       act=F.relu, use_bias=True).
    in_features, out_features = 32, 64
    batch = 8
    dropout_p = 0.5

    key = jax.random.PRNGKey(0)
    kx, kw, kb = jax.random.split(key, 3)
    x = jax.random.normal(kx, (batch, in_features), dtype=jnp.float32)
    bound = 1.0 / math.sqrt(in_features)
    w = jax.random.uniform(kw, (in_features, out_features), jnp.float32,
                           minval=-bound, maxval=bound)
    b = jax.random.uniform(kb, (1, out_features), jnp.float32,
                           minval=-bound, maxval=bound)

    # Eval mode (dropout is identity), default bf16 MXU path, single-K kernel.
    layer = PallasLinear(w, b, dropout=dropout_p)
    out = jax.block_until_ready(layer(x))
    ref_bf = jnp.maximum(
        jnp.dot(x.astype(jnp.bfloat16), w.astype(jnp.bfloat16),
                preferred_element_type=jnp.float32) + b, 0.0)
    assert out.shape == (batch, out_features)
    assert jnp.allclose(out, ref_bf, atol=2e-2, rtol=2e-2), "bf16 eval mismatch"

    # f32 compute path, tight check against the exact reference.
    layer_f32 = PallasLinear(w, b, dropout=dropout_p, compute_dtype=None)
    out32 = jax.block_until_ready(layer_f32(x))
    ref32 = jnp.maximum(
        jnp.dot(x, w, precision=lax.Precision.HIGHEST) + b, 0.0)
    assert jnp.allclose(out32, ref32, atol=1e-4, rtol=1e-4), "f32 eval mismatch"

    # Multi-tile (M, N, K) grid with padding, f32 path, small explicit tiles.
    k2 = jax.random.split(jax.random.PRNGKey(1), 3)
    m2, kk2, n2 = 16, 260, 300
    x2 = jax.random.normal(k2[0], (m2, kk2), jnp.float32)
    w2 = jax.random.normal(k2[1], (kk2, n2), jnp.float32) * 0.05
    b2 = jax.random.normal(k2[2], (1, n2), jnp.float32) * 0.05
    layer2 = PallasLinear(w2, b2, dropout=dropout_p, tm=8, tn=128, tk=128,
                          compute_dtype=None)
    out2 = jax.block_until_ready(layer2(x2))
    ref2 = jnp.maximum(
        jnp.dot(x2, w2, precision=lax.Precision.HIGHEST) + b2, 0.0)
    assert jnp.allclose(out2, ref2, atol=2e-3, rtol=2e-3), "tiled mismatch"

    # Training mode: dropout in the single-K kernel.
    out_tr = jax.block_until_ready(layer(x, training=True, seed=7))
    assert out_tr.shape == (batch, out_features)
    assert bool(jnp.all(out_tr >= 0.0)) and bool(jnp.all(jnp.isfinite(out_tr)))

    # Training mode: dropout in the K-grid finalize branch (previously failing
    # path: program_id is now hoisted out of the pl.when body).
    out_tr2 = jax.block_until_ready(layer2(x2, training=True, seed=123))
    assert out_tr2.shape == (m2, n2)
    assert bool(jnp.all(out_tr2 >= 0.0)) and bool(jnp.all(jnp.isfinite(out_tr2)))

    print("KERNEL_OK")
</pallas_src>

<mosaic_0001>
module attributes {stable_mosaic.version = 11 : i64} {
  func.func @_linear_kernel_k1(%arg0: i32, %arg1: i32, %arg2: memref<1xi32, #tpu.memory_space<smem>>, %arg3: memref<8x128xbf16, #tpu.memory_space<vmem>>, %arg4: memref<128x128xbf16, #tpu.memory_space<vmem>>, %arg5: memref<1x128xf32, #tpu.memory_space<vmem>>, %arg6: memref<8x128xf32, #tpu.memory_space<vmem>>) attributes {dimension_semantics = [#tpu.dimension_semantics<parallel>, #tpu.dimension_semantics<parallel>], iteration_bounds = array<i64: 1, 1>, scalar_prefetch = 1 : i64, scratch_operands = 0 : i64, tpu.core_type = #tpu.core_type<tc>, window_params = [{transform_indices = @transform_0, window_bounds = array<i64: 8, 128>}, {transform_indices = @transform_1, window_bounds = array<i64: 128, 128>}, {transform_indices = @transform_2, window_bounds = array<i64: 1, 128>}, {transform_indices = @transform_3, window_bounds = array<i64: 8, 128>}]} {
    %c0 = arith.constant 0 : index
    %c0_0 = arith.constant 0 : index
    %0 = vector.load %arg3[%c0, %c0_0] : memref<8x128xbf16, #tpu.memory_space<vmem>>, vector<8x128xbf16>
    %c0_1 = arith.constant 0 : index
    %c0_2 = arith.constant 0 : index
    %1 = vector.load %arg4[%c0_1, %c0_2] : memref<128x128xbf16, #tpu.memory_space<vmem>>, vector<128x128xbf16>
    %cst = arith.constant dense<0.000000e+00> : vector<8x128xf32>
    %2 = tpu.matmul %0, %1, %cst {dimension_numbers = #tpu.dot_dimension_numbers<[1], [0], [0], [1], [0, 0, 1, 1], [], []>} : vector<8x128xbf16>, vector<128x128xbf16>, vector<8x128xf32> -> vector<8x128xf32>
    %c0_3 = arith.constant 0 : index
    %c0_4 = arith.constant 0 : index
    %3 = vector.load %arg5[%c0_3, %c0_4] : memref<1x128xf32, #tpu.memory_space<vmem>>, vector<1x128xf32>
    %4 = vector.broadcast %3 : vector<1x128xf32> to vector<8x128xf32>
    %5 = arith.addf %2, %4 : vector<8x128xf32>
    %cst_5 = arith.constant 0.000000e+00 : f32
    %6 = vector.broadcast %cst_5 : f32 to vector<8x128xf32>
    %7 = arith.maximumf %5, %6 : vector<8x128xf32>
    %c0_6 = arith.constant 0 : index
    %c0_7 = arith.constant 0 : index
    %8 = vector.load %arg6[%c0_6, %c0_7] : memref<8x128xf32, #tpu.memory_space<vmem>>, vector<8x128xf32>
    tpu.vector_store %arg6[%c0_6, %c0_7], %7 {strides = array<i32>} : memref<8x128xf32, #tpu.memory_space<vmem>>, vector<8x128xf32>,
    return
  }
  func.func @transform_0(%arg0: i32, %arg1: i32, %arg2: memref<1xi32, #tpu.memory_space<smem>>) -> (i32, i32) {
    %c0_i32 = arith.constant 0 : i32
    %c0_i32_0 = arith.constant 0 : i32
    return %arg0, %c0_i32 : i32, i32
  }
  func.func @transform_1(%arg0: i32, %arg1: i32, %arg2: memref<1xi32, #tpu.memory_space<smem>>) -> (i32, i32) {
    %c0_i32 = arith.constant 0 : i32
    %c0_i32_0 = arith.constant 0 : i32
    return %c0_i32, %arg1 : i32, i32
  }
  func.func @transform_2(%arg0: i32, %arg1: i32, %arg2: memref<1xi32, #tpu.memory_space<smem>>) -> (i32, i32) {
    %c0_i32 = arith.constant 0 : i32
    %c0_i32_0 = arith.constant 0 : i32
    return %c0_i32, %arg1 : i32, i32
  }
  func.func @transform_3(%arg0: i32, %arg1: i32, %arg2: memref<1xi32, #tpu.memory_space<smem>>) -> (i32, i32) {
    %c0_i32 = arith.constant 0 : i32
    return %arg0, %arg1 : i32, i32
  }
}

</mosaic_0001>

<llo_original>
// kernel: tpu_custom_call.1
$region0: #{tpu_custom_call.1}
  #allocation0 [shape = 'u32[]', space=smem, size = 0x4, offset = 0x4, fixed_abs, tag = 'smem constant byte address 0x4 - core index']
  #allocation1 [shape = 'u32[144,128]{1,0:T(1,128)}', space=vmem, size = 0x12000, scoped, tag = 'internal scratch']
  #allocation2 [shape = 's32[1]{0}', space=sflag, size = 0x4, scoped, tag = 'scoped memory for tpu_custom_call.1']
  #allocation3 [shape = 's32[1]{0:T(128)S(6)}', space=smem, size = 0x200, scoped, tag = 'prefetched SMEM operand 0']
  %s0 = inlined_call_operand.<no memory space> [shape: s32[1], index: 0, kind: input, shape index: {}]
  %s1 = inlined_call_operand.hbm [shape: bf16[8,128], index: 1, kind: input, shape index: {}]
  %s2 = inlined_call_operand.hbm [shape: bf16[128,128], index: 2, kind: input, shape index: {}]
  %s3 = inlined_call_operand.vmem [shape: f32[1,128], index: 3, kind: input, shape index: {}]
  %s4 = inlined_call_operand.hbm [shape: f32[8,128], index: 4, kind: output, shape index: {}]
  %s5 = sld [smem:[#allocation0]]
  $region30: #{tpu_custom_call.1} parent=0
    _
  %s7 = ssub.s32 1, %s5
  %s8 = scalar_select 0, %s7, %s5
  %9 = sst [smem:[#allocation3]] %s0
  $region1: #{tpu_custom_call.1} parent=0
    #allocation4 [shape = 'u8[2048]{0}', space=vmem, size = 0x800, scoped, tag = 'input window, operand 1, single buffered']
    #allocation5 [shape = 's32[1]{0}', space=sflag, size = 0x4, scoped, tag = 'scoped memory for tpu_custom_call.1']
    #allocation6 [shape = 's32[1]{0}', space=sflag, size = 0x4, scoped, tag = 'scoped memory for tpu_custom_call.1']
    #allocation7 [shape = 'u8[32768]{0}', space=vmem, size = 0x8000, scoped, tag = 'input window, operand 2, single buffered']
    #allocation8 [shape = 's32[1]{0}', space=sflag, size = 0x4, scoped, tag = 'scoped memory for tpu_custom_call.1']
    #allocation9 [shape = 'u8[4096]{0}', space=vmem, size = 0x1000, scoped, tag = 'output window, operand 0, single buffered']
    %10 = vsyncpa [#allocation5], 0
    %11 = vsyncpa [#allocation8], 0
    %12 = vsyncpa [#allocation6], 0
    // Predicated region
    $region2: #{tpu_custom_call.1} parent=1 // pred_check
      _
    $region3: #{tpu_custom_call.1} parent=1 // pred_check_branch
      %14 = sbr.rel (0) target = $region5
    $region4: #{tpu_custom_call.1} parent=1 // pred_region
      %s16 = ssub.s32 64, 64
      %17 = vsyncadd [#allocation5], %s16
      %s19 = sshll.u32 [#allocation4], 4
      %s20 = int_to_ptr.vmem [resolvable:$true] %s19
      %22 = dma.hbm_to_vmem [thread:$0]  %s1, 64, %s20, [#allocation5]
    $region5: #{tpu_custom_call.1} parent=1 // pred_fallthru
      _
    // Predicated region
    $region6: #{tpu_custom_call.1} parent=1 // pred_check
      _
    $region7: #{tpu_custom_call.1} parent=1 // pred_check_branch
      %24 = sbr.rel (0) target = $region9
    $region8: #{tpu_custom_call.1} parent=1 // pred_region
      %s26 = ssub.s32 1024, 1024
      %27 = vsyncadd [#allocation8], %s26
      %s28 = sshll.u32 [#allocation7], 4
      %s29 = int_to_ptr.vmem [resolvable:$true] %s28
      %34 = dma.hbm_to_vmem [thread:$0]  %s2, 1024, %s29, [#allocation8], 64, 64, 4
    $region9: #{tpu_custom_call.1} parent=1 // pred_fallthru
      _
    // Predicated region
    $region10: #{tpu_custom_call.1} parent=1 // pred_check
      _
    $region11: #{tpu_custom_call.1} parent=1 // pred_check_branch
      %36 = sbr.rel (0) target = $region13
    $region12: #{tpu_custom_call.1} parent=1 // pred_region
      _
    $region13: #{tpu_custom_call.1} parent=1 // pred_fallthru
      _
    // Predicated region
    $region14: #{tpu_custom_call.1} parent=1 // pred_check
      _
    $region15: #{tpu_custom_call.1} parent=1 // pred_check_branch
      %38 = sbr.rel (0) target = $region17
    $region16: #{tpu_custom_call.1} parent=1 // pred_region
      %39 = dma.done [#allocation5], 64
    $region17: #{tpu_custom_call.1} parent=1 // pred_fallthru
      _
    // Predicated region
    $region18: #{tpu_custom_call.1} parent=1 // pred_check
      _
    $region19: #{tpu_custom_call.1} parent=1 // pred_check_branch
      %41 = sbr.rel (0) target = $region21
    $region20: #{tpu_custom_call.1} parent=1 // pred_region
      %42 = dma.done [#allocation8], 1024
    $region21: #{tpu_custom_call.1} parent=1 // pred_fallthru
      _
    %v44 = vld [vmem:[#allocation4] sm:$0xf]
    %v45 = vld [vmem:[#allocation7] sm:$0xf]
    %v46 = vld [vmem:[#allocation7 + $0x4] sm:$0xf]
    %v47 = vld [vmem:[#allocation7 + $0x8] sm:$0xf]
    %v48 = vld [vmem:[#allocation7 + $0xc] sm:$0xf]
    %v49 = vld [vmem:[#allocation7 + $0x10] sm:$0xf]
    %v50 = vld [vmem:[#allocation7 + $0x14] sm:$0xf]
    %v51 = vld [vmem:[#allocation7 + $0x18] sm:$0xf]
    %v52 = vld [vmem:[#allocation7 + $0x1c] sm:$0xf]
    %v53 = vld [vmem:[#allocation7 + $0x20] sm:$0xf]
    %v54 = vld [vmem:[#allocation7 + $0x24] sm:$0xf]
    %v55 = vld [vmem:[#allocation7 + $0x28] sm:$0xf]
    %v56 = vld [vmem:[#allocation7 + $0x2c] sm:$0xf]
    %v57 = vld [vmem:[#allocation7 + $0x30] sm:$0xf]
    %v58 = vld [vmem:[#allocation7 + $0x34] sm:$0xf]
    %v59 = vld [vmem:[#allocation7 + $0x38] sm:$0xf]
    %v60 = vld [vmem:[#allocation7 + $0x3c] sm:$0xf]
    %v61 = vld [vmem:[%s3] sm:$0x1]
    %v63 = vlaneseq
    %v64 = vshrl.u32 %v63, 7
    %v65 = vsub.s32 0, %v64
    %v66 = vrot.slane %v61, %v65
    %v84 = vunpack.c.l.b16 %v45
    %v85 = vunpack.c.l.b16 %v46
    %v86 = vunpack.c.l.b16 %v47
    %v87 = vunpack.c.l.b16 %v48
    %v88 = vunpack.c.l.b16 %v49
    %v89 = vunpack.c.l.b16 %v50
    %v90 = vunpack.c.l.b16 %v51
    %v91 = vunpack.c.l.b16 %v52
    %v92 = vunpack.c.l.b16 %v53
    %v93 = vunpack.c.l.b16 %v54
    %v94 = vunpack.c.l.b16 %v55
    %v95 = vunpack.c.l.b16 %v56
    %v96 = vunpack.c.l.b16 %v57
    %v97 = vunpack.c.l.b16 %v58
    %v98 = vunpack.c.l.b16 %v59
    %v99 = vunpack.c.l.b16 %v60
    %v100 = vpack.c.b16 %v85, %v84
    %v101 = vpack.c.b16 %v87, %v86
    %v102 = vpack.c.b16 %v89, %v88
    %v103 = vpack.c.b16 %v91, %v90
    %v104 = vpack.c.b16 %v93, %v92
    %v105 = vpack.c.b16 %v95, %v94
    %v106 = vpack.c.b16 %v97, %v96
    %v107 = vpack.c.b16 %v99, %v98
    %116 = vmatprep.subr.bf16.mxu0 0
    %117 = vmatpush1.bf16.msra.mxu0 %v100
    %118 = vmatprep.subr.bf16.mxu0 0
    %119 = vmatpush1.bf16.msra.mxu0 %v101
    %120 = vmatprep.subr.bf16.mxu0 0
    %121 = vmatpush1.bf16.msra.mxu0 %v102
    %122 = vmatprep.subr.bf16.mxu0 0
    %123 = vmatpush1.bf16.msra.mxu0 %v103
    %124 = vmatprep.subr.bf16.mxu0 0
    %125 = vmatpush1.bf16.msra.mxu0 %v104
    %126 = vmatprep.subr.bf16.mxu0 0
    %127 = vmatpush1.bf16.msra.mxu0 %v105
    %128 = vmatprep.subr.bf16.mxu0 0
    %129 = vmatpush1.bf16.msra.mxu0 %v106
    %130 = vmatprep.subr.bf16.mxu0 0
    %131 = vmatpush1.bf16.msra.mxu0 %v107
    %132 = vmatprep.subr.bf16.mxu0 0
    %133 = vmatpush1.bf16.msra.mxu0 0
    %134 = vmatprep.subr.bf16.mxu0 0
    %135 = vmatpush1.bf16.msra.mxu0 0
    %136 = vmatprep.subr.bf16.mxu0 0
    %137 = vmatpush1.bf16.msra.mxu0 0
    %138 = vmatprep.subr.bf16.mxu0 0
    %139 = vmatpush1.bf16.msra.mxu0 0
    %140 = vmatprep.subr.bf16.mxu0 0
    %141 = vmatpush1.bf16.msra.mxu0 0
    %142 = vmatprep.subr.bf16.mxu0 0
    %143 = vmatpush1.bf16.msra.mxu0 0
    %144 = vmatprep.subr.bf16.mxu0 0
    %145 = vmatpush1.bf16.msra.mxu0 0
    %146 = vmatprep.subr.bf16.mxu0 0
    %147 = vmatpush1.bf16.msra.mxu0 0
    %148 = vmatprep.mubr.bf16.mxu0 0
    %149 = vmatmul.mubr.bf16.gmra.mrb[0].mxu0 %v44
    %v150 = vpop.f32.mrb[0].mxu0
    %v151 = vadd.f32 %v66, %v150
    %v152 = vpop.f32.mrb[0].mxu0
    %v153 = vpop.f32.mrb[0].mxu0
    %v154 = vpop.f32.mrb[0].mxu0
    %155 = vdwg.mxu0
    %v156 = vmax.f32 %v151, 0.0
    %157 = vst [vmem:[#allocation9] sm:$0xff] %v156
    // Predicated region
    $region22: #{tpu_custom_call.1} parent=1 // pred_check
      _
    $region23: #{tpu_custom_call.1} parent=1 // pred_check_branch
      %159 = sbr.rel (0) target = $region25
    $region24: #{tpu_custom_call.1} parent=1 // pred_region
      %s161 = ssub.s32 128, 128
      %162 = vsyncadd [#allocation6], %s161
      %s164 = sshll.u32 [#allocation9], 4
      %s165 = int_to_ptr.vmem [resolvable:$true] %s164
      %167 = dma.vmem_to_hbm [thread:$0]  %s165, 128, %s4, [#allocation6]
    $region25: #{tpu_custom_call.1} parent=1 // pred_fallthru
      _
    // Predicated region
    $region26: #{tpu_custom_call.1} parent=1 // pred_check
      _
    $region27: #{tpu_custom_call.1} parent=1 // pred_check_branch
      %169 = sbr.rel (0) target = $region29
    $region28: #{tpu_custom_call.1} parent=1 // pred_region
      %170 = dma.done [#allocation6], 128
    $region29: #{tpu_custom_call.1} parent=1 // pred_fallthru
      _
    %171 = vsyncpa [#allocation5], 1
    %172 = vsyncpa [#allocation8], 1
    %173 = vsyncpa [#allocation6], 1

</llo_original>
